<compile_context>
chip_gen: v5e
topology: v5e:2x2
jax: 0.10.0
libtpu: 0.0.40
codegen_flags: <defaults>
</compile_context>

<pallas_src>
import functools

import jax
import jax.numpy as jnp
from jax.experimental import pallas as pl
from jax.experimental.pallas import tpu as pltpu

_LANE = 128
_SUBLANE = 8
_ROW_TILE = 256  # adj row-tile for large graphs (multiple of 8)


def _round_up(a, b):
    return ((a + b - 1) // b) * b


# ---- pass 1: support2[tile] = relu(adj[tile] @ x @ W1 + b1) @ W2 ------------
def _pass1_kernel(*refs, reassoc):
    if reassoc:
        adj_ref, feat_ref, w1_ref, b1_ref, w2_ref, s2_ref = refs
        # (adj_tile @ x) @ W1 : adj-side contraction over the narrower padded dim.
        ax = jnp.dot(adj_ref[...], feat_ref[...],
                     preferred_element_type=jnp.float32)
        h1 = jnp.dot(ax.astype(jnp.bfloat16), w1_ref[...],
                     preferred_element_type=jnp.float32)
    else:
        adj_ref, feat_ref, b1_ref, w2_ref, s2_ref = refs
        # feat already holds x @ W1 (hoisted once in the wrapper).
        h1 = jnp.dot(adj_ref[...], feat_ref[...],
                     preferred_element_type=jnp.float32)
    h1 = jnp.maximum(h1 + b1_ref[...], 0.0)
    # TODO(synk): training-mode dropout (pltpu.prng_seed/prng_random_bits mask)
    # not implemented — inference (training=False) only.
    s2_ref[...] = jnp.dot(h1.astype(jnp.bfloat16), w2_ref[...],
                          preferred_element_type=jnp.float32
                          ).astype(s2_ref.dtype)


# ---- pass 2: per-tile node-max of adj[tile] @ support2, + b2 ----------------
def _pass2_kernel(adj_ref, s2_ref, b2_ref, out_ref, *, tile, n_real, need_mask):
    h2 = jnp.dot(adj_ref[...], s2_ref[...],
                 preferred_element_type=jnp.float32)
    if need_mask:
        # Zero-padded adj rows would contribute spurious 0 logits to the max.
        row0 = pl.program_id(0) * tile
        rows = row0 + jax.lax.broadcasted_iota(jnp.int32, (tile, 1), 0)
        h2 = jnp.where(rows < n_real, h2, -jnp.inf)
    m = jnp.max(h2, axis=0, keepdims=True) + b2_ref[...]   # b2 after the max
    out_ref[...] = jnp.broadcast_to(m, out_ref.shape)       # unmasked (8,128) store


@jax.jit
def gcn_hinge_forward(x, adj, w1, b1, w2, b2):
    n, nfeat = x.shape
    nhid = w1.shape[1]
    nout = w2.shape[1]

    tile = min(_ROW_TILE, _round_up(n, _SUBLANE))
    n_pad = _round_up(n, tile)
    num_tiles = n_pad // tile

    # Zero-pad nodes: padded adj columns are zero (padded support2 rows never
    # contribute); padded adj rows are masked to -inf before the node-max.
    adj_p = jnp.zeros((n_pad, n_pad), jnp.float32).at[:n, :n].set(adj)
    x_p = jnp.zeros((n_pad, nfeat), jnp.float32).at[:n, :].set(x)

    # Lane-pad the tiny output dim (nout=2) to 128; padded columns are exact
    # zeros and are sliced away right below — keep the slice next to the call.
    nout_p = _round_up(nout, _LANE)
    w2_p = jnp.zeros((nhid, nout_p), jnp.float32).at[:, :nout].set(w2)
    b2_p = jnp.zeros((1, nout_p), jnp.float32).at[:, :nout].set(b2)
    b1_2d = b1.reshape(1, nhid).astype(jnp.float32)

    # bf16 MXU operands, f32 accumulation.
    adj_bf = adj_p.astype(jnp.bfloat16)
    w2_bf = w2_p.astype(jnp.bfloat16)

    # Layer-1 association chosen on MXU-padded lane widths (not raw dims).
    reassoc = pl.cdiv(nfeat, _LANE) <= pl.cdiv(nhid, _LANE)

    adj_spec = pl.BlockSpec((tile, n_pad), lambda i: (i, 0))
    b1_spec = pl.BlockSpec((1, nhid), lambda i: (0, 0))
    w2_spec = pl.BlockSpec((nhid, nout_p), lambda i: (0, 0))
    cparams = pltpu.CompilerParams(
        dimension_semantics=("parallel",),
        vmem_limit_bytes=32 * 1024 * 1024,
    )

    if reassoc:
        feat = x_p.astype(jnp.bfloat16)                       # (n_pad, nfeat)
        w1_bf = w1.astype(jnp.bfloat16)
        pass1_inputs = (adj_bf, feat, w1_bf, b1_2d, w2_bf)
        in_specs1 = [
            adj_spec,
            pl.BlockSpec((n_pad, nfeat), lambda i: (0, 0)),
            pl.BlockSpec((nfeat, nhid), lambda i: (0, 0)),
            b1_spec, w2_spec,
        ]
    else:
        # Hoist x @ W1 once; stream adj row-tiles against the (n_pad, nhid) slab.
        feat = jnp.dot(x_p.astype(jnp.bfloat16), w1.astype(jnp.bfloat16),
                       preferred_element_type=jnp.float32).astype(jnp.bfloat16)
        pass1_inputs = (adj_bf, feat, b1_2d, w2_bf)
        in_specs1 = [
            adj_spec,
            pl.BlockSpec((n_pad, nhid), lambda i: (0, 0)),
            b1_spec, w2_spec,
        ]

    # Pass 1: support2 = relu(adj @ x @ W1 + b1) @ W2, tiled over adj rows.
    support2 = pl.pallas_call(
        functools.partial(_pass1_kernel, reassoc=reassoc),
        out_shape=jax.ShapeDtypeStruct((n_pad, nout_p), jnp.bfloat16),
        grid=(num_tiles,),
        in_specs=in_specs1,
        out_specs=pl.BlockSpec((tile, nout_p), lambda i: (i, 0)),
        compiler_params=cparams,
    )(*pass1_inputs)

    # Pass 2: per-tile node-max of adj @ support2 (+ b2); h2 never materialized.
    partials = pl.pallas_call(
        functools.partial(_pass2_kernel, tile=tile, n_real=n,
                          need_mask=(n_pad != n)),
        out_shape=jax.ShapeDtypeStruct((num_tiles * _SUBLANE, nout_p),
                                       jnp.float32),
        grid=(num_tiles,),
        in_specs=[
            adj_spec,
            pl.BlockSpec((n_pad, nout_p), lambda i: (0, 0)),
            pl.BlockSpec((1, nout_p), lambda i: (0, 0)),
        ],
        out_specs=pl.BlockSpec((_SUBLANE, nout_p), lambda i: (i, 0)),
        compiler_params=cparams,
    )(adj_bf, support2, b2_p)

    # Tiny epilogue: max over per-tile partials, slice real logits, (1, 1, 2).
    logits = jnp.max(partials, axis=0)[:nout]
    return logits.reshape(1, 1, nout)


if __name__ == "__main__":
    # Small shapes consistent with the module: N nodes, nfeat features.
    N, NFEAT, NHID, NOUT = 8, 16, 32, 2

    key = jax.random.PRNGKey(0)
    k_x, k_adj, k_w1, k_b1, k_w2, k_b2 = jax.random.split(key, 6)

    x = jax.random.normal(k_x, (N, NFEAT), dtype=jnp.float32)

    # Symmetric, row-normalized adjacency with self-loops (typical GCN input).
    a = jax.random.uniform(k_adj, (N, N), dtype=jnp.float32)
    a = (a + a.T) * 0.5 + jnp.eye(N, dtype=jnp.float32)
    adj = a / jnp.sum(a, axis=1, keepdims=True)

    # Deterministic parameter init (GraphConvolution uses uniform(-s, s)).
    s1 = 1.0 / jnp.sqrt(jnp.float32(NHID))
    s2 = 1.0 / jnp.sqrt(jnp.float32(NOUT))
    w1 = jax.random.uniform(k_w1, (NFEAT, NHID), jnp.float32, -s1, s1)
    b1 = jax.random.uniform(k_b1, (NHID,), jnp.float32, -s1, s1)
    w2 = jax.random.uniform(k_w2, (NHID, NOUT), jnp.float32, -s2, s2)
    b2 = jax.random.uniform(k_b2, (NOUT,), jnp.float32, -s2, s2)

    out = gcn_hinge_forward(x, adj, w1, b1, w2, b2)
    jax.block_until_ready(out)

    # Pure-f32 JAX reference in the original PyTorch association order.
    # Tolerance is widened because the kernel feeds bf16 operands to the MXU
    # (f32 accumulation) and reassociates layer 1.
    h1 = jnp.maximum(adj @ (x @ w1) + b1, 0.0)
    h2 = adj @ (h1 @ w2) + b2
    ref = jnp.max(h2, axis=0).reshape(1, 1, NOUT)
    assert out.shape == (1, 1, NOUT), out.shape
    assert jnp.allclose(out, ref, atol=7e-2, rtol=7e-2), (out, ref)

    print("KERNEL_OK")
</pallas_src>

<mosaic_0001>
module attributes {stable_mosaic.version = 11 : i64} {
  func.func @_pass1_kernel(%arg0: i32, %arg1: memref<8x8xbf16, #tpu.memory_space<vmem>>, %arg2: memref<8x16xbf16, #tpu.memory_space<vmem>>, %arg3: memref<16x32xbf16, #tpu.memory_space<vmem>>, %arg4: memref<1x32xf32, #tpu.memory_space<vmem>>, %arg5: memref<32x128xbf16, #tpu.memory_space<vmem>>, %arg6: memref<8x128xbf16, #tpu.memory_space<vmem>>) attributes {dimension_semantics = [#tpu.dimension_semantics<parallel>], iteration_bounds = array<i64: 1>, scalar_prefetch = 0 : i64, scratch_operands = 0 : i64, tpu.core_type = #tpu.core_type<tc>, window_params = [{transform_indices = @transform_0, window_bounds = array<i64: 8, 8>}, {pipeline_mode = #tpu.pipeline_mode<synchronous>, transform_indices = @transform_1, window_bounds = array<i64: 8, 16>}, {pipeline_mode = #tpu.pipeline_mode<synchronous>, transform_indices = @transform_2, window_bounds = array<i64: 16, 32>}, {pipeline_mode = #tpu.pipeline_mode<synchronous>, transform_indices = @transform_3, window_bounds = array<i64: 1, 32>}, {pipeline_mode = #tpu.pipeline_mode<synchronous>, transform_indices = @transform_4, window_bounds = array<i64: 32, 128>}, {transform_indices = @transform_5, window_bounds = array<i64: 8, 128>}]} {
    %c0 = arith.constant 0 : index
    %c0_0 = arith.constant 0 : index
    %0 = vector.load %arg1[%c0, %c0_0] : memref<8x8xbf16, #tpu.memory_space<vmem>>, vector<8x8xbf16>
    %c0_1 = arith.constant 0 : index
    %c0_2 = arith.constant 0 : index
    %1 = vector.load %arg2[%c0_1, %c0_2] : memref<8x16xbf16, #tpu.memory_space<vmem>>, vector<8x16xbf16>
    %cst = arith.constant dense<0.000000e+00> : vector<8x16xf32>
    %2 = tpu.matmul %0, %1, %cst {dimension_numbers = #tpu.dot_dimension_numbers<[1], [0], [0], [1], [0, 0, 1, 1], [], []>} : vector<8x8xbf16>, vector<8x16xbf16>, vector<8x16xf32> -> vector<8x16xf32>
    %3 = arith.truncf %2 : vector<8x16xf32> to vector<8x16xbf16>
    %c0_3 = arith.constant 0 : index
    %c0_4 = arith.constant 0 : index
    %4 = vector.load %arg3[%c0_3, %c0_4] : memref<16x32xbf16, #tpu.memory_space<vmem>>, vector<16x32xbf16>
    %cst_5 = arith.constant dense<0.000000e+00> : vector<8x32xf32>
    %5 = tpu.matmul %3, %4, %cst_5 {dimension_numbers = #tpu.dot_dimension_numbers<[1], [0], [0], [1], [0, 0, 1, 1], [], []>} : vector<8x16xbf16>, vector<16x32xbf16>, vector<8x32xf32> -> vector<8x32xf32>
    %c0_6 = arith.constant 0 : index
    %c0_7 = arith.constant 0 : index
    %6 = vector.load %arg4[%c0_6, %c0_7] : memref<1x32xf32, #tpu.memory_space<vmem>>, vector<1x32xf32>
    %7 = vector.broadcast %6 : vector<1x32xf32> to vector<8x32xf32>
    %8 = arith.addf %5, %7 : vector<8x32xf32>
    %cst_8 = arith.constant 0.000000e+00 : f32
    %9 = vector.broadcast %cst_8 : f32 to vector<8x32xf32>
    %10 = arith.maximumf %8, %9 : vector<8x32xf32>
    %11 = arith.truncf %10 : vector<8x32xf32> to vector<8x32xbf16>
    %c0_9 = arith.constant 0 : index
    %c0_10 = arith.constant 0 : index
    %12 = vector.load %arg5[%c0_9, %c0_10] : memref<32x128xbf16, #tpu.memory_space<vmem>>, vector<32x128xbf16>
    %cst_11 = arith.constant dense<0.000000e+00> : vector<8x128xf32>
    %13 = tpu.matmul %11, %12, %cst_11 {dimension_numbers = #tpu.dot_dimension_numbers<[1], [0], [0], [1], [0, 0, 1, 1], [], []>} : vector<8x32xbf16>, vector<32x128xbf16>, vector<8x128xf32> -> vector<8x128xf32>
    %14 = arith.truncf %13 : vector<8x128xf32> to vector<8x128xbf16>
    %c0_12 = arith.constant 0 : index
    %c0_13 = arith.constant 0 : index
    %15 = vector.load %arg6[%c0_12, %c0_13] : memref<8x128xbf16, #tpu.memory_space<vmem>>, vector<8x128xbf16>
    tpu.vector_store %arg6[%c0_12, %c0_13], %14 {strides = array<i32>} : memref<8x128xbf16, #tpu.memory_space<vmem>>, vector<8x128xbf16>,
    return
  }
  func.func @transform_0(%arg0: i32) -> (i32, i32) {
    %c0_i32 = arith.constant 0 : i32
    %c0_i32_0 = arith.constant 0 : i32
    return %arg0, %c0_i32 : i32, i32
  }
  func.func @transform_1(%arg0: i32) -> (i32, i32) {
    %c0_i32 = arith.constant 0 : i32
    %c0_i32_0 = arith.constant 0 : i32
    %c0_i32_1 = arith.constant 0 : i32
    return %c0_i32, %c0_i32_0 : i32, i32
  }
  func.func @transform_2(%arg0: i32) -> (i32, i32) {
    %c0_i32 = arith.constant 0 : i32
    %c0_i32_0 = arith.constant 0 : i32
    %c0_i32_1 = arith.constant 0 : i32
    return %c0_i32, %c0_i32_0 : i32, i32
  }
  func.func @transform_3(%arg0: i32) -> (i32, i32) {
    %c0_i32 = arith.constant 0 : i32
    %c0_i32_0 = arith.constant 0 : i32
    %c0_i32_1 = arith.constant 0 : i32
    return %c0_i32, %c0_i32_0 : i32, i32
  }
  func.func @transform_4(%arg0: i32) -> (i32, i32) {
    %c0_i32 = arith.constant 0 : i32
    %c0_i32_0 = arith.constant 0 : i32
    %c0_i32_1 = arith.constant 0 : i32
    return %c0_i32, %c0_i32_0 : i32, i32
  }
  func.func @transform_5(%arg0: i32) -> (i32, i32) {
    %c0_i32 = arith.constant 0 : i32
    %c0_i32_0 = arith.constant 0 : i32
    return %arg0, %c0_i32 : i32, i32
  }
}

module attributes {stable_mosaic.version = 11 : i64} {
  func.func @_pass2_kernel(%arg0: i32, %arg1: memref<8x8xbf16, #tpu.memory_space<vmem>>, %arg2: memref<8x128xbf16, #tpu.memory_space<vmem>>, %arg3: memref<1x128xf32, #tpu.memory_space<vmem>>, %arg4: memref<8x128xf32, #tpu.memory_space<vmem>>) attributes {dimension_semantics = [#tpu.dimension_semantics<parallel>], iteration_bounds = array<i64: 1>, scalar_prefetch = 0 : i64, scratch_operands = 0 : i64, tpu.core_type = #tpu.core_type<tc>, window_params = [{transform_indices = @transform_0, window_bounds = array<i64: 8, 8>}, {pipeline_mode = #tpu.pipeline_mode<synchronous>, transform_indices = @transform_1, window_bounds = array<i64: 8, 128>}, {pipeline_mode = #tpu.pipeline_mode<synchronous>, transform_indices = @transform_2, window_bounds = array<i64: 1, 128>}, {transform_indices = @transform_3, window_bounds = array<i64: 8, 128>}]} {
    %c0 = arith.constant 0 : index
    %c0_0 = arith.constant 0 : index
    %0 = vector.load %arg1[%c0, %c0_0] : memref<8x8xbf16, #tpu.memory_space<vmem>>, vector<8x8xbf16>
    %c0_1 = arith.constant 0 : index
    %c0_2 = arith.constant 0 : index
    %1 = vector.load %arg2[%c0_1, %c0_2] : memref<8x128xbf16, #tpu.memory_space<vmem>>, vector<8x128xbf16>
    %cst = arith.constant dense<0.000000e+00> : vector<8x128xf32>
    %2 = tpu.matmul %0, %1, %cst {dimension_numbers = #tpu.dot_dimension_numbers<[1], [0], [0], [1], [0, 0, 1, 1], [], []>} : vector<8x8xbf16>, vector<8x128xbf16>, vector<8x128xf32> -> vector<8x128xf32>
    %cst_3 = arith.constant dense<0xFF800000> : vector<128xf32>
    %3 = vector.multi_reduction <maximumf>, %2, %cst_3 [0] : vector<8x128xf32> to vector<128xf32>
    %4 = vector.shape_cast %3 : vector<128xf32> to vector<1x128xf32>
    %c0_4 = arith.constant 0 : index
    %c0_5 = arith.constant 0 : index
    %5 = vector.load %arg3[%c0_4, %c0_5] : memref<1x128xf32, #tpu.memory_space<vmem>>, vector<1x128xf32>
    %6 = arith.addf %4, %5 : vector<1x128xf32>
    %7 = vector.shape_cast %6 : vector<1x128xf32> to vector<1x128xf32>
    %8 = vector.broadcast %7 : vector<1x128xf32> to vector<8x128xf32>
    %c0_6 = arith.constant 0 : index
    %c0_7 = arith.constant 0 : index
    %9 = vector.load %arg4[%c0_6, %c0_7] : memref<8x128xf32, #tpu.memory_space<vmem>>, vector<8x128xf32>
    tpu.vector_store %arg4[%c0_6, %c0_7], %8 {strides = array<i32>} : memref<8x128xf32, #tpu.memory_space<vmem>>, vector<8x128xf32>,
    return
  }
  func.func @transform_0(%arg0: i32) -> (i32, i32) {
    %c0_i32 = arith.constant 0 : i32
    %c0_i32_0 = arith.constant 0 : i32
    return %arg0, %c0_i32 : i32, i32
  }
  func.func @transform_1(%arg0: i32) -> (i32, i32) {
    %c0_i32 = arith.constant 0 : i32
    %c0_i32_0 = arith.constant 0 : i32
    %c0_i32_1 = arith.constant 0 : i32
    return %c0_i32, %c0_i32_0 : i32, i32
  }
  func.func @transform_2(%arg0: i32) -> (i32, i32) {
    %c0_i32 = arith.constant 0 : i32
    %c0_i32_0 = arith.constant 0 : i32
    %c0_i32_1 = arith.constant 0 : i32
    return %c0_i32, %c0_i32_0 : i32, i32
  }
  func.func @transform_3(%arg0: i32) -> (i32, i32) {
    %c0_i32 = arith.constant 0 : i32
    %c0_i32_0 = arith.constant 0 : i32
    return %arg0, %c0_i32 : i32, i32
  }
}

</mosaic_0001>

<llo_original>
// kernel: gcn_hinge_forward.3
$region0: #{gcn_hinge_forward.3}
  #allocation0 [shape = 'u32[]', space=smem, size = 0x4, offset = 0x4, fixed_abs, tag = 'smem constant byte address 0x4 - core index']
  #allocation1 [shape = 'u32[72,128]{1,0:T(1,128)}', space=vmem, size = 0x9000, scoped, tag = 'internal scratch']
  %s0 = inlined_call_operand.vmem [shape: bf16[8,8], index: 0, kind: input, shape index: {}]
  %s1 = inlined_call_operand.vmem [shape: bf16[8,128], index: 1, kind: input, shape index: {}]
  %s2 = inlined_call_operand.vmem [shape: f32[1,128], index: 2, kind: input, shape index: {}]
  %s3 = inlined_call_operand.vmem [shape: f32[8,128], index: 3, kind: output, shape index: {}]
  %s4 = sld [smem:[#allocation0]]
  $region22: #{gcn_hinge_forward.3} parent=0
    _
  %s6 = ssub.s32 1, %s4
  %s7 = scalar_select 0, %s6, %s4
  // Predicated region
  $region2: #{gcn_hinge_forward.3} parent=0 // pred_check
    _
  $region3: #{gcn_hinge_forward.3} parent=0 // pred_check_branch
    %9 = sbr.rel (0) target = $region5
  $region4: #{gcn_hinge_forward.3} parent=0 // pred_region
    _
  $region5: #{gcn_hinge_forward.3} parent=0 // pred_fallthru
    _
  // Predicated region
  $region6: #{gcn_hinge_forward.3} parent=0 // pred_check
    _
  $region7: #{gcn_hinge_forward.3} parent=0 // pred_check_branch
    %11 = sbr.rel (0) target = $region9
  $region8: #{gcn_hinge_forward.3} parent=0 // pred_region
    _
  $region9: #{gcn_hinge_forward.3} parent=0 // pred_fallthru
    _
  // Predicated region
  $region10: #{gcn_hinge_forward.3} parent=0 // pred_check
    _
  $region11: #{gcn_hinge_forward.3} parent=0 // pred_check_branch
    %13 = sbr.rel (0) target = $region13
  $region12: #{gcn_hinge_forward.3} parent=0 // pred_region
    _
  $region13: #{gcn_hinge_forward.3} parent=0 // pred_fallthru
    _
  %v15 = vld [vmem:[%s0] sm:$0xf]
  %v16 = vld [vmem:[%s1] sm:$0xf]
  %vm17 = vcmask 64512
  %v19 = vsel %vm17, %v15, 0
  %vm21 = vcmask 1043456
  %v23 = vsel %vm21, %v16, 0
  %25 = vmatpush.bf16.msra.mxu0 0
  %26 = vmatpush.bf16.msra.mxu0 0
  %27 = vmatpush.bf16.msra.mxu0 0
  %28 = vmatpush.bf16.msra.mxu0 0
  %29 = vmatpush.bf16.msra.mxu0 0
  %30 = vmatpush.bf16.msra.mxu0 0
  %31 = vmatpush.bf16.msra.mxu0 0
  %32 = vmatpush.bf16.msra.mxu0 %v23
  %33 = vmatmul.bf16.gmra.mxu0 %v19
  %v34 = vpop.f32.mrf.mxu0
  %v35 = vadd.f32 0.0, %v34
  %v36 = vpop.f32.mrf.mxu0
  %37 = vdwg.mxu0
  %v38 = vrot.slane %v35, 4
  %v39 = vmax.f32 %v35, %v38
  %v40 = vrot.slane %v39, 2
  %v41 = vmax.f32 %v39, %v40
  %v42 = vrot.slane %v41, 1
  %v43 = vmax.f32 %v41, %v42
  %v44 = vld [vmem:[%s2] sm:$0x1]
  %v45 = vadd.f32 %v43, %v44
  %v46 = vperm.slane %v45, 0
  %47 = vst [vmem:[%s3] sm:$0xff] %v46
  // Predicated region
  $region14: #{gcn_hinge_forward.3} parent=0 // pred_check
    _
  $region15: #{gcn_hinge_forward.3} parent=0 // pred_check_branch
    %49 = sbr.rel (0) target = $region17
  $region16: #{gcn_hinge_forward.3} parent=0 // pred_region
    _
  $region17: #{gcn_hinge_forward.3} parent=0 // pred_fallthru
    _
  // Predicated region
  $region18: #{gcn_hinge_forward.3} parent=0 // pred_check
    _
  $region19: #{gcn_hinge_forward.3} parent=0 // pred_check_branch
    %51 = sbr.rel (0) target = $region21
  $region20: #{gcn_hinge_forward.3} parent=0 // pred_region
    _
  $region21: #{gcn_hinge_forward.3} parent=0 // pred_fallthru
    _

// kernel: gcn_hinge_forward.2
$region0: #{gcn_hinge_forward.2}
  #allocation0 [shape = 'u32[]', space=smem, size = 0x4, offset = 0x4, fixed_abs, tag = 'smem constant byte address 0x4 - core index']
  #allocation1 [shape = 'u32[72,128]{1,0:T(1,128)}', space=vmem, size = 0x9000, scoped, tag = 'internal scratch']
  %s0 = inlined_call_operand.vmem [shape: bf16[8,8], index: 0, kind: input, shape index: {}]
  %s1 = inlined_call_operand.vmem [shape: bf16[8,16], index: 1, kind: input, shape index: {}]
  %s2 = inlined_call_operand.vmem [shape: bf16[16,32], index: 2, kind: input, shape index: {}]
  %s3 = inlined_call_operand.vmem [shape: f32[1,32], index: 3, kind: input, shape index: {}]
  %s4 = inlined_call_operand.vmem [shape: bf16[32,128], index: 4, kind: input, shape index: {}]
  %s5 = inlined_call_operand.vmem [shape: bf16[8,128], index: 5, kind: output, shape index: {}]
  %s6 = sld [smem:[#allocation0]]
  $region30: #{gcn_hinge_forward.2} parent=0
    _
  %s8 = ssub.s32 1, %s6
  %s9 = scalar_select 0, %s8, %s6
  // Predicated region
  $region2: #{gcn_hinge_forward.2} parent=0 // pred_check
    _
  $region3: #{gcn_hinge_forward.2} parent=0 // pred_check_branch
    %11 = sbr.rel (0) target = $region5
  $region4: #{gcn_hinge_forward.2} parent=0 // pred_region
    _
  $region5: #{gcn_hinge_forward.2} parent=0 // pred_fallthru
    _
  // Predicated region
  $region6: #{gcn_hinge_forward.2} parent=0 // pred_check
    _
  $region7: #{gcn_hinge_forward.2} parent=0 // pred_check_branch
    %13 = sbr.rel (0) target = $region9
  $region8: #{gcn_hinge_forward.2} parent=0 // pred_region
    _
  $region9: #{gcn_hinge_forward.2} parent=0 // pred_fallthru
    _
  // Predicated region
  $region10: #{gcn_hinge_forward.2} parent=0 // pred_check
    _
  $region11: #{gcn_hinge_forward.2} parent=0 // pred_check_branch
    %15 = sbr.rel (0) target = $region13
  $region12: #{gcn_hinge_forward.2} parent=0 // pred_region
    _
  $region13: #{gcn_hinge_forward.2} parent=0 // pred_fallthru
    _
  // Predicated region
  $region14: #{gcn_hinge_forward.2} parent=0 // pred_check
    _
  $region15: #{gcn_hinge_forward.2} parent=0 // pred_check_branch
    %17 = sbr.rel (0) target = $region17
  $region16: #{gcn_hinge_forward.2} parent=0 // pred_region
    _
  $region17: #{gcn_hinge_forward.2} parent=0 // pred_fallthru
    _
  // Predicated region
  $region18: #{gcn_hinge_forward.2} parent=0 // pred_check
    _
  $region19: #{gcn_hinge_forward.2} parent=0 // pred_check_branch
    %19 = sbr.rel (0) target = $region21
  $region20: #{gcn_hinge_forward.2} parent=0 // pred_region
    _
  $region21: #{gcn_hinge_forward.2} parent=0 // pred_fallthru
    _
  %v21 = vld [vmem:[%s0] sm:$0xf]
  %v22 = vld [vmem:[%s1] sm:$0xf]
  %vm23 = vcmask 64512
  %v25 = vsel %vm23, %v21, 0
  %vm27 = vcmask 1043456
  %v29 = vsel %vm27, %v22, 0
  %31 = vmatpush.bf16.msra.mxu0 0
  %32 = vmatpush.bf16.msra.mxu0 0
  %33 = vmatpush.bf16.msra.mxu0 0
  %34 = vmatpush.bf16.msra.mxu0 0
  %35 = vmatpush.bf16.msra.mxu0 0
  %36 = vmatpush.bf16.msra.mxu0 0
  %37 = vmatpush.bf16.msra.mxu0 0
  %38 = vmatpush.bf16.msra.mxu0 %v29
  %39 = vmatmul.bf16.gmra.mxu0 %v25
  %v40 = vpop.f32.mrf.mxu0
  %v41 = vadd.f32 0.0, %v40
  %v42 = vpop.f32.mrf.mxu0
  %43 = vdwg.mxu0
  %v44 = vpack.c.bf16 %v41, %v41
  %v45 = vld [vmem:[%s2] sm:$0xf]
  %v46 = vld [vmem:[%s2 + $0x4] sm:$0xf]
  %v47 = vld [vmem:[%s3] sm:$0x1]
  %v49 = vperm.slane %v47, 0
  %v53 = vunpack.c.l.b16 %v45
  %v54 = vunpack.c.l.b16 %v46
  %v55 = vpack.c.b16 %v54, %v53
  %vm57 = vcmask 130048
  %v59 = vsel %vm57, %v44, 0
  %61 = vmatpush.bf16.msra.mxu0 0
  %62 = vmatpush.bf16.msra.mxu0 0
  %63 = vmatpush.bf16.msra.mxu0 0
  %64 = vmatpush.bf16.msra.mxu0 0
  %65 = vmatpush.bf16.msra.mxu0 0
  %66 = vmatpush.bf16.msra.mxu0 0
  %67 = vmatpush.bf16.msra.mxu0 0
  %68 = vmatpush.bf16.msra.mxu0 %v55
  %69 = vmatmul.bf16.gmra.mxu0 %v59
  %v70 = vpop.f32.mrf.mxu0
  %v71 = vadd.f32 %v49, %v70
  %v72 = vpop.f32.mrf.mxu0
  %73 = vdwg.mxu0
  %v74 = vmax.f32 %v71, 0.0
  %v75 = vpack.c.bf16 %v74, %v74
  %v76 = vld [vmem:[%s4] sm:$0xf]
  %v77 = vld [vmem:[%s4 + $0x4] sm:$0xf]
  %v78 = vld [vmem:[%s4 + $0x8] sm:$0xf]
  %v79 = vld [vmem:[%s4 + $0xc] sm:$0xf]
  %v84 = vunpack.c.l.b16 %v76
  %v85 = vunpack.c.l.b16 %v77
  %v86 = vunpack.c.l.b16 %v78
  %v87 = vunpack.c.l.b16 %v79
  %v88 = vpack.c.b16 %v85, %v84
  %v89 = vpack.c.b16 %v87, %v86
  %vm92 = vcmask 261120
  %v94 = vsel %vm92, %v75, 0
  %96 = vmatpush.bf16.msra.mxu0 0
  %97 = vmatpush.bf16.msra.mxu0 0
  %98 = vmatpush.bf16.msra.mxu0 0
  %99 = vmatpush.bf16.msra.mxu0 0
  %100 = vmatpush.bf16.msra.mxu0 0
  %101 = vmatpush.bf16.msra.mxu0 0
  %102 = vmatpush.bf16.msra.mxu0 %v89
  %103 = vmatpush.bf16.msra.mxu0 %v88
  %104 = vmatmul.bf16.gmra.mxu0 %v94
  %v105 = vpop.f32.mrf.mxu0
  %v106 = vadd.f32 0.0, %v105
  %v107 = vpop.f32.mrf.mxu0
  %108 = vdwg.mxu0
  %v109 = vpack.c.bf16 %v106, %v106
  %110 = vst [vmem:[%s5] sm:$0xf] %v109
  // Predicated region
  $region22: #{gcn_hinge_forward.2} parent=0 // pred_check
    _
  $region23: #{gcn_hinge_forward.2} parent=0 // pred_check_branch
    %112 = sbr.rel (0) target = $region25
  $region24: #{gcn_hinge_forward.2} parent=0 // pred_region
    _
  $region25: #{gcn_hinge_forward.2} parent=0 // pred_fallthru
    _
  // Predicated region
  $region26: #{gcn_hinge_forward.2} parent=0 // pred_check
    _
  $region27: #{gcn_hinge_forward.2} parent=0 // pred_check_branch
    %114 = sbr.rel (0) target = $region29
  $region28: #{gcn_hinge_forward.2} parent=0 // pred_region
    _
  $region29: #{gcn_hinge_forward.2} parent=0 // pred_fallthru
    _

</llo_original>
